<compile_context>
chip_gen: v7x
topology: tpu7x:2x2x1
jax: 0.10.0
libtpu: 0.0.40
codegen_flags: <defaults>
</compile_context>

<pallas_src>
import functools

import jax
import jax.numpy as jnp
from jax.experimental import pallas as pl
from jax.experimental.pallas import tpu as pltpu

_MIB = 1024 * 1024


# ---------------------------------------------------------------------------
# Kernel
# ---------------------------------------------------------------------------

def _ffn_kernel(x_ref, w1_ref, b1_ref, w2_ref, b2_ref, o_ref, acc_ref):
    """Grid = (row blocks, d_ff chunks); d_ff is the innermost reduction axis.

    Per step:   acc += relu(x_tile @ W1[:, f] + b1[f]) @ W2[f, :]
    Last chunk: o = (acc + b2).astype(out dtype)
    """
    f = pl.program_id(1)

    @pl.when(f == 0)
    def _():
        acc_ref[...] = jnp.zeros_like(acc_ref)

    x = x_ref[...].astype(w1_ref.dtype)            # in-kernel bf16 cast (no extra HBM pass)
    h = jnp.dot(x, w1_ref[...], preferred_element_type=jnp.float32) + b1_ref[...]
    h = jnp.maximum(h, 0.0)
    acc_ref[...] += jnp.dot(h.astype(w2_ref.dtype), w2_ref[...],
                            preferred_element_type=jnp.float32)

    @pl.when(f == pl.num_programs(1) - 1)
    def _():
        o_ref[...] = (acc_ref[...] + b2_ref[...]).astype(o_ref.dtype)


# ---------------------------------------------------------------------------
# Tiling / VMEM planning
# ---------------------------------------------------------------------------

def _round_up(x, m):
    return ((x + m - 1) // m) * m


def _round_down(x, m):
    return (x // m) * m


def _vmem_budget_bytes():
    """Generation-aware plan: (tile-planner budget, scoped vmem limit)."""
    try:
        cap = int(pltpu.get_tpu_info().vmem_capacity_bytes)
    except Exception:
        cap = 64 * _MIB            # conservative fallback = v7x per-TensorCore VMEM
    cap = max(cap, 32 * _MIB)
    budget = int(cap * 0.6)        # what the tile planner may spend
    limit = int(cap * 0.75)        # scoped limit for Mosaic (headroom for internals)
    return budget, limit


def _pick_tf(D, F, budget):
    """d_ff chunk: a multiple of 128 that divides F exactly, sized so the
    double-buffered bf16 W1/W2 chunks use <= ~40% of the budget."""
    w_budget = int(budget * 0.4)
    full_resident = 2 * (2 * D * F * 2 + F * 4 + D * 4)   # double-buffered bf16 W1+W2, f32 b1/b2
    if F % 128 != 0 or full_resident <= w_budget:
        return F
    per128 = 2 * (2 * D * 2 + 4) * 128                    # bytes per 128-wide d_ff chunk (2 bufs)
    target = min(F, max(128, (w_budget // per128) * 128))
    for cand in range(target, 127, -128):                  # must divide F: padded lanes on a
        if F % cand == 0:                                   # contracted axis would corrupt acc
            return cand
    return F


def _pick_tm(M, D, tf, x_itemsize, out_itemsize, budget, max_rows=1024):
    """Largest row tile fitting the budget; multiple of 256 when large."""
    fixed = 2 * (2 * D * tf * 2 + tf * 4 + D * 4)          # weight/bias double-buffers
    per_row = (2 * D * x_itemsize        # x tile (double-buffered, input dtype)
               + 2 * D * out_itemsize    # out tile (double-buffered, input dtype)
               + D * 4                   # f32 accumulator scratch
               + D * 2                   # bf16 copy of the x tile inside the kernel
               + tf * (4 + 2))           # f32 h chunk + bf16 copy for the 2nd matmul
    avail = max(budget - fixed, 16 * per_row)
    rows = avail // per_row
    rows = _round_down(rows, 256) if rows >= 256 else max(16, _round_down(rows, 8))
    rows = min(rows, max_rows, max(_round_up(M, 8), 8))
    return int(max(8, _round_down(rows, 8)))


# ---------------------------------------------------------------------------
# Wrapper
# ---------------------------------------------------------------------------

@functools.partial(jax.jit, static_argnames=("block_rows", "block_ff"))
def position_wise_feed_forward(x, w1, b1, w2, b2, *, block_rows=None, block_ff=None):
    """y = relu(x @ w1 + b1) @ w2 + b2 for x of shape [..., d_model].

    Output has x's shape and dtype (matches the PyTorch module). MXU inputs run
    in bf16 with f32 accumulation. `block_rows` / `block_ff` are optional
    overrides; they are validated/clamped against the VMEM budget.
    """
    orig_shape = x.shape
    D = orig_shape[-1]
    F = w1.shape[1]
    x2 = x.reshape(-1, D)                 # no pad / no dtype pass over x
    M = x2.shape[0]

    out_dtype = x.dtype
    x_bytes = jnp.dtype(x.dtype).itemsize
    out_bytes = jnp.dtype(out_dtype).itemsize

    budget, vmem_limit = _vmem_budget_bytes()

    # d_ff (reduction) chunk size.
    tf = _pick_tf(D, F, budget)
    if (block_ff is not None and F % int(block_ff) == 0
            and (int(block_ff) % 128 == 0 or int(block_ff) == F)):
        tf = int(block_ff)
    nf = pl.cdiv(F, tf)

    # Row tile, clamped to the VMEM budget even when user-supplied.
    tm = _pick_tm(M, D, tf, x_bytes, out_bytes, budget)
    if block_rows is not None:
        tm = min(max(8, _round_down(int(block_rows), 8)), tm)
    ni = pl.cdiv(M, tm)

    # Weights: one wrapper-side bf16 cast (they are re-read for every row block,
    # so streaming them at half width wins). Biases stay f32 — they are added
    # into the f32 accumulation.
    w1c = w1.astype(jnp.bfloat16)
    w2c = w2.astype(jnp.bfloat16)
    b1r = b1.reshape(1, F).astype(jnp.float32)
    b2r = b2.reshape(1, D).astype(jnp.float32)

    cost = pl.CostEstimate(
        flops=4 * M * D * F,
        transcendentals=0,
        bytes_accessed=(M * D * (x_bytes + out_bytes)       # read x, write y
                        + 2 * D * F * 2 + (D + F) * 4),      # bf16 weights + f32 biases
    )

    # TODO(synk): when nf == 1 the weight index_maps are constant; single-buffer
    # them (pipeline_mode=pl.Buffered(1)) to reclaim the duplicate weight VMEM
    # once that path is validated on all generations.
    # TODO(synk): on v7x, fp8 weight quantization (f32 accumulation) would halve
    # resident weight VMEM and double MXU rate if accuracy allows.
    out = pl.pallas_call(
        _ffn_kernel,
        out_shape=jax.ShapeDtypeStruct((M, D), out_dtype),
        grid=(ni, nf),                                        # reduction axis last
        in_specs=[
            pl.BlockSpec((tm, D), lambda i, f: (i, 0)),       # x: row-tiled, held across f
            pl.BlockSpec((D, tf), lambda i, f: (0, f)),       # W1 d_ff chunk
            pl.BlockSpec((1, tf), lambda i, f: (0, f)),       # b1 d_ff chunk
            pl.BlockSpec((tf, D), lambda i, f: (f, 0)),       # W2 d_ff chunk
            pl.BlockSpec((1, D), lambda i, f: (0, 0)),        # b2: resident
        ],
        out_specs=pl.BlockSpec((tm, D), lambda i, f: (i, 0)),  # resident across f
        scratch_shapes=[pltpu.VMEM((tm, D), jnp.float32)],     # f32 accumulator
        compiler_params=pltpu.CompilerParams(
            dimension_semantics=("parallel", "arbitrary"),      # rows megacore-shardable
            vmem_limit_bytes=vmem_limit,
        ),
        cost_estimate=cost,
    )(x2, w1c, b1r, w2c, b2r)

    return out.reshape(orig_shape)


# ---------------------------------------------------------------------------
# Main
# ---------------------------------------------------------------------------

if __name__ == "__main__":
    d_model = 128
    d_ff = 256
    B, S = 2, 9       # M = 18 -> exercises a ragged last row block (no wrapper pad)

    key = jax.random.PRNGKey(0)
    kx, k1, kb1, k2, kb2 = jax.random.split(key, 5)

    # nn.Linear-style init: U(-1/sqrt(fan_in), 1/sqrt(fan_in))
    lim1 = 1.0 / (d_model ** 0.5)
    lim2 = 1.0 / (d_ff ** 0.5)
    w1 = jax.random.uniform(k1, (d_model, d_ff), jnp.float32, -lim1, lim1)
    b1 = jax.random.uniform(kb1, (d_ff,), jnp.float32, -lim1, lim1)
    w2 = jax.random.uniform(k2, (d_ff, d_model), jnp.float32, -lim2, lim2)
    b2 = jax.random.uniform(kb2, (d_model,), jnp.float32, -lim2, lim2)

    x = jax.random.normal(kx, (B, S, d_model), jnp.float32)

    # block_rows=8, block_ff=128 => grid (3, 2): multi-step pipelined row axis
    # (with a ragged last block) plus a 2-step d_ff reduction with accumulator.
    out = position_wise_feed_forward(x, w1, b1, w2, b2, block_rows=8, block_ff=128)
    out = jax.block_until_ready(out)

    # Pure-JAX f32 reference (bf16 MXU inputs => loose tolerance).
    ref = jnp.maximum(x @ w1 + b1, 0.0) @ w2 + b2

    assert out.shape == (B, S, d_model), out.shape
    assert out.dtype == x.dtype, out.dtype
    assert bool(jnp.all(jnp.isfinite(out)))
    assert bool(jnp.allclose(out, ref, rtol=2e-2, atol=2e-2)), (
        float(jnp.max(jnp.abs(out - ref)))
    )

    print("KERNEL_OK")
</pallas_src>

<mosaic_0001>
module attributes {stable_mosaic.version = 11 : i64} {
  func.func @_ffn_kernel(%arg0: i32, %arg1: i32, %arg2: memref<8x128xf32, #tpu.memory_space<vmem>>, %arg3: memref<128x128xbf16, #tpu.memory_space<vmem>>, %arg4: memref<1x128xf32, #tpu.memory_space<vmem>>, %arg5: memref<128x128xbf16, #tpu.memory_space<vmem>>, %arg6: memref<1x128xf32, #tpu.memory_space<vmem>>, %arg7: memref<8x128xf32, #tpu.memory_space<vmem>>, %arg8: memref<8x128xf32, #tpu.memory_space<vmem>>) attributes {dimension_semantics = [#tpu.dimension_semantics<parallel>, #tpu.dimension_semantics<arbitrary>], iteration_bounds = array<i64: 3, 2>, scalar_prefetch = 0 : i64, scratch_operands = 1 : i64, tpu.core_type = #tpu.core_type<tc>, window_params = [{transform_indices = @transform_0, window_bounds = array<i64: 8, 128>}, {transform_indices = @transform_1, window_bounds = array<i64: 128, 128>}, {transform_indices = @transform_2, window_bounds = array<i64: 1, 128>}, {transform_indices = @transform_3, window_bounds = array<i64: 128, 128>}, {pipeline_mode = #tpu.pipeline_mode<synchronous>, transform_indices = @transform_4, window_bounds = array<i64: 1, 128>}, {transform_indices = @transform_5, window_bounds = array<i64: 8, 128>}]} {
    %c0_i32 = arith.constant 0 : i32
    %0 = arith.cmpi eq, %arg1, %c0_i32 : i32
    %1 = arith.extui %0 : i1 to i32
    %c0_i32_0 = arith.constant 0 : i32
    %2 = arith.cmpi ne, %1, %c0_i32_0 : i32
    scf.if %2 {
      %cst_15 = arith.constant 0.000000e+00 : f32
      %21 = vector.broadcast %cst_15 : f32 to vector<8x128xf32>
      %c0_16 = arith.constant 0 : index
      %c0_17 = arith.constant 0 : index
      %22 = vector.load %arg8[%c0_16, %c0_17] : memref<8x128xf32, #tpu.memory_space<vmem>>, vector<8x128xf32>
      tpu.vector_store %arg8[%c0_16, %c0_17], %21 {strides = array<i32>} : memref<8x128xf32, #tpu.memory_space<vmem>>, vector<8x128xf32>,
    } else {
    }
    %c0 = arith.constant 0 : index
    %c0_1 = arith.constant 0 : index
    %3 = vector.load %arg2[%c0, %c0_1] : memref<8x128xf32, #tpu.memory_space<vmem>>, vector<8x128xf32>
    %4 = arith.truncf %3 : vector<8x128xf32> to vector<8x128xbf16>
    %c0_2 = arith.constant 0 : index
    %c0_3 = arith.constant 0 : index
    %5 = vector.load %arg3[%c0_2, %c0_3] : memref<128x128xbf16, #tpu.memory_space<vmem>>, vector<128x128xbf16>
    %cst = arith.constant dense<0.000000e+00> : vector<8x128xf32>
    %6 = tpu.matmul %4, %5, %cst {dimension_numbers = #tpu.dot_dimension_numbers<[1], [0], [0], [1], [0, 0, 1, 1], [], []>} : vector<8x128xbf16>, vector<128x128xbf16>, vector<8x128xf32> -> vector<8x128xf32>
    %c0_4 = arith.constant 0 : index
    %c0_5 = arith.constant 0 : index
    %7 = vector.load %arg4[%c0_4, %c0_5] : memref<1x128xf32, #tpu.memory_space<vmem>>, vector<1x128xf32>
    %8 = vector.broadcast %7 : vector<1x128xf32> to vector<8x128xf32>
    %9 = arith.addf %6, %8 : vector<8x128xf32>
    %cst_6 = arith.constant 0.000000e+00 : f32
    %10 = vector.broadcast %cst_6 : f32 to vector<8x128xf32>
    %11 = arith.maximumf %9, %10 : vector<8x128xf32>
    %c0_7 = arith.constant 0 : index
    %c0_8 = arith.constant 0 : index
    %12 = vector.load %arg8[%c0_7, %c0_8] : memref<8x128xf32, #tpu.memory_space<vmem>>, vector<8x128xf32>
    %13 = arith.truncf %11 : vector<8x128xf32> to vector<8x128xbf16>
    %c0_9 = arith.constant 0 : index
    %c0_10 = arith.constant 0 : index
    %14 = vector.load %arg5[%c0_9, %c0_10] : memref<128x128xbf16, #tpu.memory_space<vmem>>, vector<128x128xbf16>
    %cst_11 = arith.constant dense<0.000000e+00> : vector<8x128xf32>
    %15 = tpu.matmul %13, %14, %cst_11 {dimension_numbers = #tpu.dot_dimension_numbers<[1], [0], [0], [1], [0, 0, 1, 1], [], []>} : vector<8x128xbf16>, vector<128x128xbf16>, vector<8x128xf32> -> vector<8x128xf32>
    %16 = arith.addf %12, %15 : vector<8x128xf32>
    %c0_12 = arith.constant 0 : index
    %c0_13 = arith.constant 0 : index
    %17 = vector.load %arg8[%c0_12, %c0_13] : memref<8x128xf32, #tpu.memory_space<vmem>>, vector<8x128xf32>
    tpu.vector_store %arg8[%c0_12, %c0_13], %16 {strides = array<i32>} : memref<8x128xf32, #tpu.memory_space<vmem>>, vector<8x128xf32>,
    %c1_i32 = arith.constant 1 : i32
    %18 = arith.cmpi eq, %arg1, %c1_i32 : i32
    %19 = arith.extui %18 : i1 to i32
    %c0_i32_14 = arith.constant 0 : i32
    %20 = arith.cmpi ne, %19, %c0_i32_14 : i32
    scf.if %20 {
      %c0_15 = arith.constant 0 : index
      %c0_16 = arith.constant 0 : index
      %21 = vector.load %arg8[%c0_15, %c0_16] : memref<8x128xf32, #tpu.memory_space<vmem>>, vector<8x128xf32>
      %c0_17 = arith.constant 0 : index
      %c0_18 = arith.constant 0 : index
      %22 = vector.load %arg6[%c0_17, %c0_18] : memref<1x128xf32, #tpu.memory_space<vmem>>, vector<1x128xf32>
      %23 = vector.broadcast %22 : vector<1x128xf32> to vector<8x128xf32>
      %24 = arith.addf %21, %23 : vector<8x128xf32>
      %c0_19 = arith.constant 0 : index
      %c0_20 = arith.constant 0 : index
      %25 = vector.load %arg7[%c0_19, %c0_20] : memref<8x128xf32, #tpu.memory_space<vmem>>, vector<8x128xf32>
      tpu.vector_store %arg7[%c0_19, %c0_20], %24 {strides = array<i32>} : memref<8x128xf32, #tpu.memory_space<vmem>>, vector<8x128xf32>,
    } else {
    }
    return
  }
  func.func @transform_0(%arg0: i32, %arg1: i32) -> (i32, i32) {
    %c0_i32 = arith.constant 0 : i32
    %c0_i32_0 = arith.constant 0 : i32
    return %arg0, %c0_i32 : i32, i32
  }
  func.func @transform_1(%arg0: i32, %arg1: i32) -> (i32, i32) {
    %c0_i32 = arith.constant 0 : i32
    %c0_i32_0 = arith.constant 0 : i32
    return %c0_i32, %arg1 : i32, i32
  }
  func.func @transform_2(%arg0: i32, %arg1: i32) -> (i32, i32) {
    %c0_i32 = arith.constant 0 : i32
    %c0_i32_0 = arith.constant 0 : i32
    return %c0_i32, %arg1 : i32, i32
  }
  func.func @transform_3(%arg0: i32, %arg1: i32) -> (i32, i32) {
    %c0_i32 = arith.constant 0 : i32
    %c0_i32_0 = arith.constant 0 : i32
    return %arg1, %c0_i32 : i32, i32
  }
  func.func @transform_4(%arg0: i32, %arg1: i32) -> (i32, i32) {
    %c0_i32 = arith.constant 0 : i32
    %c0_i32_0 = arith.constant 0 : i32
    %c0_i32_1 = arith.constant 0 : i32
    return %c0_i32, %c0_i32_0 : i32, i32
  }
  func.func @transform_5(%arg0: i32, %arg1: i32) -> (i32, i32) {
    %c0_i32 = arith.constant 0 : i32
    %c0_i32_0 = arith.constant 0 : i32
    return %arg0, %c0_i32 : i32, i32
  }
}

</mosaic_0001>

<llo_original>
// kernel: position_wise_feed_forward.1
$region0: #{position_wise_feed_forward.1}
  #allocation0 [shape = 'u32[]', space=smem, size = 0x4, offset = 0x4, fixed_abs, tag = 'smem constant byte address 0x4 - core index']
  #allocation1 [shape = 'u32[144,128]{1,0:T(1,128)}', space=vmem, size = 0x12000, scoped, tag = 'internal scratch']
  #allocation2 [shape = 'f32[8,128]{1,0:T(8,128)}', space=vmem, size = 0x1000, scoped, tag = 'scratch operand']
  %s0 = inlined_call_operand.vmem [shape: f32[18,128], index: 0, kind: input, shape index: {}]
  %s1 = inlined_call_operand.vmem [shape: bf16[128,256], index: 1, kind: input, shape index: {}]
  %s2 = inlined_call_operand.vmem [shape: f32[1,256], index: 2, kind: input, shape index: {}]
  %s3 = inlined_call_operand.vmem [shape: bf16[256,128], index: 3, kind: input, shape index: {}]
  %s4 = inlined_call_operand.vmem [shape: f32[1,128], index: 4, kind: input, shape index: {}]
  %s5 = inlined_call_operand.vmem [shape: f32[18,128], index: 5, kind: output, shape index: {}]
  %s6 = sld [smem:[#allocation0]]
  $region102: #{position_wise_feed_forward.1} parent=0
    _
  %s8 = ssub.s32 1, %s6
  %s9 = scalar_select 0, %s8, %s6
  $region1: #{position_wise_feed_forward.1} parent=0
    #allocation3 [shape = 'u8[65536]{0}', space=vmem, size = 0x10000, scoped, tag = 'input window, operand 1']
    loop: start=0, step=1, limit=8
    $region2: #{position_wise_feed_forward.1} parent=1 // loop_pre_header
      _
    $region3: #{position_wise_feed_forward.1} parent=1 // loop_header
      %s11 = sphi 0, %s15
      %p12 = scmp.ge.s32.totalorder %s11, 8
      %s18 = sphi 0, %s30
      %s19 = sphi 0, %s26
      %s20 = sphi 0, %s18
      %s21 = sphi 0, %s19
      %s22 = sphi 0, %s20
      %s23 = sphi 0, %s21
      %s33 = sphi 0, %s35
      %s36 = sphi 0, %s33
      %s37 = sphi 0, %s36
      %s53 = sphi 0, %s37
      %s59 = sphi 0, %s61
      %s62 = sphi 0, %s59
      %s63 = sphi 0, %s62
      %s79 = sphi 0, %s63
      %s85 = sphi 0, %s87
      %s88 = sphi 0, %s85
      %s89 = sphi 0, %s88
      %s105 = sphi 0, %s89
      %s111 = sphi 0, %s113
      %s114 = sphi 0, %s111
      %s115 = sphi 0, %s114
      %s131 = sphi 0, %s115
      %s135 = sphi 0, %s135
      %s137 = sphi 0, %s135
      %s138 = sphi 0, %s137
      %s152 = sphi 0, %s138
      %s158 = sphi 0, %s160
      %s161 = sphi 0, %s158
      %s162 = sphi 0, %s161
      %s178 = sphi 0, %s162
    $region4: #{position_wise_feed_forward.1} parent=1 // loop_header_branch
      %14 = sbr.rel (%p12) target = $region8
    $region5: #{position_wise_feed_forward.1} parent=1 // loop_body
      %s16 = ssub.s32 %s11, 1
      %s17 = ssub.s32 %s11, 2
      %s24 = sadd.s32 1, %s19
      %p25 = scmp.ge.s32.totalorder %s24, 2
      %s26 = scalar_select %p25, 0, %s24
      %s27 = sadd.s32 1, %s18
      %s28 = scalar_select %p25, %s27, %s18
      %p29 = scmp.ge.s32.totalorder %s28, 3
      %s30 = scalar_select %p29, 0, %s28
      %s31 = ssub.s32 %s18, %s30
      %p32 = scmp.eq.s32.totalorder %s31, 0
      %s34 = sadd.s32 %s33, 1
      %s35 = scalar_select %p32, %s33, %s34
      %p38 = pneg %p32
      %p39 = scmp.eq.s32.totalorder %s11, 5
      %p40 = por %p38, %p39
      %p41 = scmp.ne.s32.totalorder %s33, %s36
      %p42 = scmp.eq.s32.totalorder %s11, 0
      %p43 = por %p41, %p42
      %p44 = scmp.ne.s32.totalorder %s33, %s36
      %p45 = scmp.eq.s32.totalorder %s16, 5
      %p46 = por %p44, %p45
      %p47 = scmp.ne.s32.totalorder %s36, %s37
      %p48 = scmp.eq.s32.totalorder %s16, 0
      %p49 = por %p47, %p48
      %p50 = scmp.ne.s32.totalorder %s36, %s37
      %p51 = scmp.eq.s32.totalorder %s17, 5
      %p52 = por %p50, %p51
      %p54 = scmp.ne.s32.totalorder %s37, %s53
      %p55 = scmp.eq.s32.totalorder %s17, 0
      %p56 = por %p54, %p55
      %s57 = ssub.s32 %s19, %s26
      %p58 = scmp.eq.s32.totalorder %s57, 0
      %s60 = sadd.s32 %s59, 1
      %s61 = scalar_select %p58, %s59, %s60
      %p64 = pneg %p58
      %p65 = scmp.eq.s32.totalorder %s11, 5
      %p66 = por %p64, %p65
      %p67 = scmp.ne.s32.totalorder %s59, %s62
      %p68 = scmp.eq.s32.totalorder %s11, 0
      %p69 = por %p67, %p68
      %p70 = scmp.ne.s32.totalorder %s59, %s62
      %p71 = scmp.eq.s32.totalorder %s16, 5
      %p72 = por %p70, %p71
      %p73 = scmp.ne.s32.totalorder %s62, %s63
      %p74 = scmp.eq.s32.totalorder %s16, 0
      %p75 = por %p73, %p74
      %p76 = scmp.ne.s32.totalorder %s62, %s63
      %p77 = scmp.eq.s32.totalorder %s17, 5
      %p78 = por %p76, %p77
      %p80 = scmp.ne.s32.totalorder %s63, %s79
      %p81 = scmp.eq.s32.totalorder %s17, 0
      %p82 = por %p80, %p81
      %s83 = ssub.s32 %s19, %s26
      %p84 = scmp.eq.s32.totalorder %s83, 0
      %s86 = sadd.s32 %s85, 1
      %s87 = scalar_select %p84, %s85, %s86
      %p90 = pneg %p84
      %p91 = scmp.eq.s32.totalorder %s11, 5
      %p92 = por %p90, %p91
      %p93 = scmp.ne.s32.totalorder %s85, %s88
      %p94 = scmp.eq.s32.totalorder %s11, 0
      %p95 = por %p93, %p94
      %p96 = scmp.ne.s32.totalorder %s85, %s88
      %p97 = scmp.eq.s32.totalorder %s16, 5
      %p98 = por %p96, %p97
      %p99 = scmp.ne.s32.totalorder %s88, %s89
      %p100 = scmp.eq.s32.totalorder %s16, 0
      %p101 = por %p99, %p100
      %p102 = scmp.ne.s32.totalorder %s88, %s89
      %p103 = scmp.eq.s32.totalorder %s17, 5
      %p104 = por %p102, %p103
      %p106 = scmp.ne.s32.totalorder %s89, %s105
      %p107 = scmp.eq.s32.totalorder %s17, 0
      %p108 = por %p106, %p107
      %s109 = ssub.s32 %s19, %s26
      %p110 = scmp.eq.s32.totalorder %s109, 0
      %s112 = sadd.s32 %s111, 1
      %s113 = scalar_select %p110, %s111, %s112
      %p116 = pneg %p110
      %p117 = scmp.eq.s32.totalorder %s11, 5
      %p118 = por %p116, %p117
      %p119 = scmp.ne.s32.totalorder %s111, %s114
      %p120 = scmp.eq.s32.totalorder %s11, 0
      %p121 = por %p119, %p120
      %p122 = scmp.ne.s32.totalorder %s111, %s114
      %p123 = scmp.eq.s32.totalorder %s16, 5
      %p124 = por %p122, %p123
      %p125 = scmp.ne.s32.totalorder %s114, %s115
      %p126 = scmp.eq.s32.totalorder %s16, 0
      %p127 = por %p125, %p126
      %p128 = scmp.ne.s32.totalorder %s114, %s115
      %p129 = scmp.eq.s32.totalorder %s17, 5
      %p130 = por %p128, %p129
      %p132 = scmp.ne.s32.totalorder %s115, %s131
      %p133 = scmp.eq.s32.totalorder %s17, 0
      %p134 = por %p132, %p133
      %s136 = sadd.s32 %s135, 1
      %p139 = scmp.eq.s32.totalorder %s11, 5
      %p140 = scmp.ne.s32.totalorder %s135, %s137
      %p141 = scmp.eq.s32.totalorder %s11, 0
      %p142 = por %p140, %p141
      %p143 = scmp.ne.s32.totalorder %s135, %s137
      %p144 = scmp.eq.s32.totalorder %s16, 5
      %p145 = por %p143, %p144
      %p146 = scmp.ne.s32.totalorder %s137, %s138
      %p147 = scmp.eq.s32.totalorder %s16, 0
      %p148 = por %p146, %p147
      %p149 = scmp.ne.s32.totalorder %s137, %s138
      %p150 = scmp.eq.s32.totalorder %s17, 5
      %p151 = por %p149, %p150
      %p153 = scmp.ne.s32.totalorder %s138, %s152
      %p154 = scmp.eq.s32.totalorder %s17, 0
      %p155 = por %p153, %p154
      %s156 = ssub.s32 %s18, %s30
      %p157 = scmp.eq.s32.totalorder %s156, 0
      %s159 = sadd.s32 %s158, 1
      %s160 = scalar_select %p157, %s158, %s159
      %p163 = pneg %p157
      %p164 = scmp.eq.s32.totalorder %s11, 5
      %p165 = por %p163, %p164
      %p166 = scmp.ne.s32.totalorder %s158, %s161
      %p167 = scmp.eq.s32.totalorder %s11, 0
      %p168 = por %p166, %p167
      %p169 = scmp.ne.s32.totalorder %s158, %s161
      %p170 = scmp.eq.s32.totalorder %s16, 5
      %p171 = por %p169, %p170
      %p172 = scmp.ne.s32.totalorder %s161, %s162
      %p173 = scmp.eq.s32.totalorder %s16, 0
      %p174 = por %p172, %p173
      %p175 = scmp.ne.s32.totalorder %s161, %s162
      %p176 = scmp.eq.s32.totalorder %s17, 5
      %p177 = por %p175, %p176
      %p179 = scmp.ne.s32.totalorder %s162, %s178
      %p180 = scmp.eq.s32.totalorder %s17, 0
      %p181 = por %p179, %p180
      %p182 = scmp.le.s32.totalorder 1, %s11
      %p183 = scmp.lt.s32.totalorder %s11, 7
      %p184 = pnand %p182, %p183
      %p185 = pneg %p184
      // Predicated region
      $region9: #{position_wise_feed_forward.1} parent=5 // pred_check
        _
      $region10: #{position_wise_feed_forward.1} parent=5 // pred_check_branch
        %187 = sbr.rel (%p184) target = $region12
      $region11: #{position_wise_feed_forward.1} parent=5 // pred_region
        %s188 = ssub.s32 %s11, 1
        // Predicated region
        $region13: #{position_wise_feed_forward.1} parent=11 // pred_check
          %p189 = pneg %p148
        $region14: #{position_wise_feed_forward.1} parent=11 // pred_check_branch
          %191 = sbr.rel (%p189) target = $region16
        $region15: #{position_wise_feed_forward.1} parent=11 // pred_region
          _
        $region16: #{position_wise_feed_forward.1} parent=11 // pred_fallthru
          _
      $region12: #{position_wise_feed_forward.1} parent=5 // pred_fallthru
        _
      %p192 = scmp.lt.s32.totalorder %s11, 6
      // Predicated region
      $region17: #{position_wise_feed_forward.1} parent=5 // pred_check
        %p193 = pneg %p192
      $region18: #{position_wise_feed_forward.1} parent=5 // pred_check_branch
        %195 = sbr.rel (%p193) target = $region20
      $region19: #{position_wise_feed_forward.1} parent=5 // pred_region
        // Predicated region
        $region21: #{position_wise_feed_forward.1} parent=19 // pred_check
          %p196 = pneg %p43
        $region22: #{position_wise_feed_forward.1} parent=19 // pred_check_branch
          %198 = sbr.rel (%p196) target = $region24
        $region23: #{position_wise_feed_forward.1} parent=19 // pred_region
          %p199 = scmp.lt.s32.totalorder %s18, 2
          %s200 = scalar_select %p199, %s18, 2
          %s201 = smul.addr %s200, 8
          %s202 = scalar_lea.vmem %s0, %s201
        $region24: #{position_wise_feed_forward.1} parent=19 // pred_fallthru
          _
        // Predicated region
        $region25: #{position_wise_feed_forward.1} parent=19 // pred_check
          %p203 = pneg %p69
        $region26: #{position_wise_feed_forward.1} parent=19 // pred_check_branch
          %205 = sbr.rel (%p203) target = $region28
        $region27: #{position_wise_feed_forward.1} parent=19 // pred_region
          %s206 = sand.u32 %s59, 1
          %s207 = sand.u32 %s59, 1
          %s208 = smul.addr %s207, 64
          %s209 = scalar_lea.vmem [#allocation3], %s208
          %s210 = smul.addr %s19, 4
          %s211 = scalar_lea.vmem %s1, %s210
          // Predicated region
          $region29: #{position_wise_feed_forward.1} parent=27 // pred_check
            _
          $region30: #{position_wise_feed_forward.1} parent=27 // pred_check_branch
            %213 = sbr.rel (0) target = $region32
          $region31: #{position_wise_feed_forward.1} parent=27 // pred_region
            // Predicated region
            $region33: #{position_wise_feed_forward.1} parent=31 // pred_check
              _
            $region34: #{position_wise_feed_forward.1} parent=31 // pred_check_branch
              %215 = sbr.rel target = $region36
            $region35: #{position_wise_feed_forward.1} parent=31 // pred_region
              // Predicated region
              $region48: #{position_wise_feed_forward.1} parent=35 // pred_check
                _
              $region49: #{position_wise_feed_forward.1} parent=35 // pred_check_branch
                %260 = sbr.rel (0) target = $region51
              $region50: #{position_wise_feed_forward.1} parent=35 // pred_region
                loop: start=0, step=1, limit=1
                $region52: #{position_wise_feed_forward.1} parent=50 // loop_pre_header
                  _
                $region53: #{position_wise_feed_forward.1} parent=50 // loop_header
                  %s262 = sphi 0, %s266
                  %p263 = scmp.ge.s32.totalorder %s262, 1
                  %s267 = sphi %s211, %s211
                  %s268 = sphi %s209, %s209
                $region54: #{position_wise_feed_forward.1} parent=50 // loop_header_branch
                  %265 = sbr.rel (%p263) target = $region58
                $region55: #{position_wise_feed_forward.1} parent=50 // loop_body
                  _
                $region56: #{position_wise_feed_forward.1} parent=50 // loop_footer
                  %s266 = sadd.s32 1, %s262
                $region57: #{position_wise_feed_forward.1} parent=50 // loop_footer_branch
                  %261 = sbr.rel target = $region53
                $region58: #{position_wise_feed_forward.1} parent=50 // loop_exit
                  _
                loop: start=0, step=1, limit=1
                $region59: #{position_wise_feed_forward.1} parent=50 // loop_pre_header
                  _
                $region60: #{position_wise_feed_forward.1} parent=50 // loop_header
                  %s271 = sphi 0, %s275
                  %p272 = scmp.ge.s32.totalorder %s271, 1
                  %s276 = sphi %s211, %s211
                  %s277 = sphi %s209, %s209
                $region61: #{position_wise_feed_forward.1} parent=50 // loop_header_branch
                  %274 = sbr.rel (%p272) target = $region65
                $region62: #{position_wise_feed_forward.1} parent=50 // loop_body
                  %v278 = vld [vmem:[%s276] sm:$0xf]
                  %279 = vst [vmem:[%s277] sm:$0xf] %v278
                  %v280 = vld [vmem:[%s276 + $0x8] sm:$0xf]
                  %281 = vst [vmem:[%s277 + $0x4] sm:$0xf] %v280
                  %v282 = vld [vmem:[%s276 + $0x10] sm:$0xf]
                  %283 = vst [vmem:[%s277 + $0x8] sm:$0xf] %v282
                  %v284 = vld [vmem:[%s276 + $0x18] sm:$0xf]
                  %285 = vst [vmem:[%s277 + $0xc] sm:$0xf] %v284
                  %v286 = vld [vmem:[%s276 + $0x20] sm:$0xf]
                  %287 = vst [vmem:[%s277 + $0x10] sm:$0xf] %v286
                  %v288 = vld [vmem:[%s276 + $0x28] sm:$0xf]
                  %289 = vst [vmem:[%s277 + $0x14] sm:$0xf] %v288
                  %v290 = vld [vmem:[%s276 + $0x30] sm:$0xf]
                  %291 = vst [vmem:[%s277 + $0x18] sm:$0xf] %v290
                  %v292 = vld [vmem:[%s276 + $0x38] sm:$0xf]
                  %293 = vst [vmem:[%s277 + $0x1c] sm:$0xf] %v292
                  %v294 = vld [vmem:[%s276 + $0x40] sm:$0xf]
                  %295 = vst [vmem:[%s277 + $0x20] sm:$0xf] %v294
                  %v296 = vld [vmem:[%s276 + $0x48] sm:$0xf]
                  %297 = vst [vmem:[%s277 + $0x24] sm:$0xf] %v296
                  %v298 = vld [vmem:[%s276 + $0x50] sm:$0xf]
                  %299 = vst [vmem:[%s277 + $0x28] sm:$0xf] %v298
                  %v300 = vld [vmem:[%s276 + $0x58] sm:$0xf]
                  %301 = vst [vmem:[%s277 + $0x2c] sm:$0xf] %v300
                  %v302 = vld [vmem:[%s276 + $0x60] sm:$0xf]
                  %303 = vst [vmem:[%s277 + $0x30] sm:$0xf] %v302
                  %v304 = vld [vmem:[%s276 + $0x68] sm:$0xf]
                  %305 = vst [vmem:[%s277 + $0x34] sm:$0xf] %v304
                  %v306 = vld [vmem:[%s276 + $0x70] sm:$0xf]
                  %307 = vst [vmem:[%s277 + $0x38] sm:$0xf] %v306
                  %v308 = vld [vmem:[%s276 + $0x78] sm:$0xf]
                  %309 = vst [vmem:[%s277 + $0x3c] sm:$0xf] %v308
                $region63: #{position_wise_feed_forward.1} parent=50 // loop_footer
                  %s275 = sadd.s32 1, %s271
                $region64: #{position_wise_feed_forward.1} parent=50 // loop_footer_branch
                  %270 = sbr.rel target = $region60
                $region65: #{position_wise_feed_forward.1} parent=50 // loop_exit
                  _
              $region51: #{position_wise_feed_forward.1} parent=35 // pred_fallthru
                _
            $region36: #{position_wise_feed_forward.1} parent=31 // pred_fallthru
              _
            // Predicated region
            $region37: #{position_wise_feed_forward.1} parent=31 // pred_check
              _
            $region38: #{position_wise_feed_forward.1} parent=31 // pred_check_branch
              %217 = sbr.rel (0) target = $region40
            $region39: #{position_wise_feed_forward.1} parent=31 // pred_region
              loop: start=0, step=1, limit=1
              $region41: #{position_wise_feed_forward.1} parent=39 // loop_pre_header
                _
              $region42: #{position_wise_feed_forward.1} parent=39 // loop_header
                %s220 = sphi 0, %s224
                %p221 = scmp.ge.s32.totalorder %s220, 1
                %s225 = sphi %s211, %s211
                %s226 = sphi %s209, %s209
              $region43: #{position_wise_feed_forward.1} parent=39 // loop_header_branch
                %223 = sbr.rel (%p221) target = $region47
              $region44: #{position_wise_feed_forward.1} parent=39 // loop_body
                %v227 = vld [vmem:[%s225] sm:$0xf]
                %228 = vst [vmem:[%s226] sm:$0xf] %v227
                %v229 = vld [vmem:[%s225 + $0x8] sm:$0xf]
                %230 = vst [vmem:[%s226 + $0x4] sm:$0xf] %v229
                %v231 = vld [vmem:[%s225 + $0x10] sm:$0xf]
                %232 = vst [vmem:[%s226 + $0x8] sm:$0xf] %v231
                %v233 = vld [vmem:[%s225 + $0x18] sm:$0xf]
                %234 = vst [vmem:[%s226 + $0xc] sm:$0xf] %v233
                %v235 = vld [vmem:[%s225 + $0x20] sm:$0xf]
                %236 = vst [vmem:[%s226 + $0x10] sm:$0xf] %v235
                %v237 = vld [vmem:[%s225 + $0x28] sm:$0xf]
                %238 = vst [vmem:[%s226 + $0x14] sm:$0xf] %v237
                %v239 = vld [vmem:[%s225 + $0x30] sm:$0xf]
                %240 = vst [vmem:[%s226 + $0x18] sm:$0xf] %v239
                %v241 = vld [vmem:[%s225 + $0x38] sm:$0xf]
                %242 = vst [vmem:[%s226 + $0x1c] sm:$0xf] %v241
                %v243 = vld [vmem:[%s225 + $0x40] sm:$0xf]
                %244 = vst [vmem:[%s226 + $0x20] sm:$0xf] %v243
                %v245 = vld [vmem:[%s225 + $0x48] sm:$0xf]
                %246 = vst [vmem:[%s226 + $0x24] sm:$0xf] %v245
                %v247 = vld [vmem:[%s225 + $0x50] sm:$0xf]
                %248 = vst [vmem:[%s226 + $0x28] sm:$0xf] %v247
                %v249 = vld [vmem:[%s225 + $0x58] sm:$0xf]
                %250 = vst [vmem:[%s226 + $0x2c] sm:$0xf] %v249
                %v251 = vld [vmem:[%s225 + $0x60] sm:$0xf]
                %252 = vst [vmem:[%s226 + $0x30] sm:$0xf] %v251
                %v253 = vld [vmem:[%s225 + $0x68] sm:$0xf]
                %254 = vst [vmem:[%s226 + $0x34] sm:$0xf] %v253
                %v255 = vld [vmem:[%s225 + $0x70] sm:$0xf]
                %256 = vst [vmem:[%s226 + $0x38] sm:$0xf] %v255
                %v257 = vld [vmem:[%s225 + $0x78] sm:$0xf]
                %258 = vst [vmem:[%s226 + $0x3c] sm:$0xf] %v257
              $region45: #{position_wise_feed_forward.1} parent=39 // loop_footer
                %s224 = sadd.s32 1, %s220
              $region46: #{position_wise_feed_forward.1} parent=39 // loop_footer_branch
                %219 = sbr.rel target = $region42
              $region47: #{position_wise_feed_forward.1} parent=39 // loop_exit
                _
            $region40: #{position_wise_feed_forward.1} parent=31 // pred_fallthru
              _
          $region32: #{position_wise_feed_forward.1} parent=27 // pred_fallthru
            _
          %310 = vnop
        $region28: #{position_wise_feed_forward.1} parent=19 // pred_fallthru
          _
        // Predicated region
        $region66: #{position_wise_feed_forward.1} parent=19 // pred_check
          %p311 = pneg %p95
        $region67: #{position_wise_feed_forward.1} parent=19 // pred_check_branch
          %313 = sbr.rel (%p311) target = $region69
        $region68: #{position_wise_feed_forward.1} parent=19 // pred_region
          %p314 = scmp.lt.s32.totalorder %s19, 1
          %s315 = scalar_select %p314, %s19, 1
          %s316 = scalar_lea.vmem %s2, %s315
        $region69: #{position_wise_feed_forward.1} parent=19 // pred_fallthru
          _
        // Predicated region
        $region70: #{position_wise_feed_forward.1} parent=19 // pred_check
          %p317 = pneg %p121
        $region71: #{position_wise_feed_forward.1} parent=19 // pred_check_branch
          %319 = sbr.rel (%p317) target = $region73
        $region72: #{position_wise_feed_forward.1} parent=19 // pred_region
          %s320 = smul.u32 16, %s19
          %p321 = scmp.lt.s32.totalorder %s320, 31
          %s322 = scalar_select %p321, %s320, 31
          %s323 = smul.addr %s322, 4
          %s324 = scalar_lea.vmem %s3, %s323
          %s325 = smul.u32 16, %s19
        $region73: #{position_wise_feed_forward.1} parent=19 // pred_fallthru
          _
      $region20: #{position_wise_feed_forward.1} parent=5 // pred_fallthru
        _
      %p326 = scmp.le.s32.totalorder 1, %s11
      %p327 = scmp.lt.s32.totalorder %s11, 7
      %p328 = pnand %p326, %p327
      %p329 = pneg %p328
      // Predicated region
      $region74: #{position_wise_feed_forward.1} parent=5 // pred_check
        _
      $region75: #{position_wise_feed_forward.1} parent=5 // pred_check_branch
        %331 = sbr.rel (%p328) target = $region77
      $region76: #{position_wise_feed_forward.1} parent=5 // pred_region
        %s332 = ssub.s32 %s11, 1
        %s333 = sand.u32 %s62, 1
        %s334 = sand.u32 %s62, 1
        %s335 = smul.addr %s334, 64
        %s336 = scalar_lea.vmem [#allocation3], %s335
        // Predicated region
        $region78: #{position_wise_feed_forward.1} parent=76 // pred_check
          %p337 = pneg %p75
        $region79: #{position_wise_feed_forward.1} parent=76 // pred_check_branch
          %339 = sbr.rel (%p337) target = $region81
        $region80: #{position_wise_feed_forward.1} parent=76 // pred_region
          _
        $region81: #{position_wise_feed_forward.1} parent=76 // pred_fallthru
          _
        %p340 = scmp.lt.s32.totalorder %s20, 2
        %s341 = scalar_select %p340, %s20, 2
        %s342 = smul.addr %s341, 8
        %s343 = scalar_lea.vmem %s0, %s342
        %p344 = pneg %p49
        %p345 = pneg %p46
        %s346 = sand.u32 %s62, 1
        %s347 = sand.u32 %s62, 1
        %s348 = smul.addr %s347, 64
        %s349 = scalar_lea.vmem [#allocation3], %s348
        %p350 = pneg %p75
        %p351 = pneg %p72
        %p352 = scmp.lt.s32.totalorder %s21, 1
        %s353 = scalar_select %p352, %s21, 1
        %s354 = scalar_lea.vmem %s2, %s353
        %p355 = pneg %p101
        %p356 = pneg %p98
        %s357 = smul.u32 16, %s21
        %p358 = scmp.lt.s32.totalorder %s357, 31
        %s359 = scalar_select %p358, %s357, 31
        %s360 = smul.addr %s359, 4
        %s361 = scalar_lea.vmem %s3, %s360
        %p362 = pneg %p127
        %p363 = pneg %p124
        %p364 = pneg %p148
        %p365 = pneg %p145
        %p366 = pneg %p174
        %p367 = pneg %p171
        %p368 = scmp.lt.s32.totalorder %s20, 2
        %s369 = scalar_select %p368, %s20, 2
        %s370 = smul.addr %s369, 8
        %s371 = scalar_lea.vmem %s5, %s370
        %p372 = scmp.lt.s32.totalorder %s20, 2
        %s373 = scalar_select %p372, %s20, 2
        %s374 = smul.addr %s373, 8
        %s375 = scalar_lea.vmem %s0, %s374
        %p376 = scmp.lt.s32.totalorder %s21, 1
        %s377 = scalar_select %p376, %s21, 1
        %s378 = scalar_lea.vmem %s2, %s377
        %s379 = smul.u32 16, %s21
        %p380 = scmp.lt.s32.totalorder %s379, 31
        %s381 = scalar_select %p380, %s379, 31
        %s382 = smul.addr %s381, 4
        %s383 = scalar_lea.vmem %s3, %s382
        %s384 = smul.u32 16, %s21
        %p385 = scmp.lt.s32.totalorder %s20, 2
        %s386 = scalar_select %p385, %s20, 2
        %s387 = smul.addr %s386, 8
        %s388 = scalar_lea.vmem %s5, %s387
        %p390 = scmp.eq.s32.totalorder %s21, 0
        // Predicated region
        $region82: #{position_wise_feed_forward.1} parent=76 // pred_check
          %p391 = pneg %p390
        $region83: #{position_wise_feed_forward.1} parent=76 // pred_check_branch
          %393 = sbr.rel (%p391) target = $region85
        $region84: #{position_wise_feed_forward.1} parent=76 // pred_region
          %394 = vst [vmem:[#allocation2] sm:$0xff] 0.0
        $region85: #{position_wise_feed_forward.1} parent=76 // pred_fallthru
          _
        %v395 = vld [vmem:[%s375] sm:$0xff]
        %v396 = vpack.c.bf16 %v395, %v395
        %v397 = vld [vmem:[%s336] sm:$0xf]
        %v398 = vld [vmem:[%s336 + $0x4] sm:$0xf]
        %v399 = vld [vmem:[%s336 + $0x8] sm:$0xf]
        %v400 = vld [vmem:[%s336 + $0xc] sm:$0xf]
        %v401 = vld [vmem:[%s336 + $0x10] sm:$0xf]
        %v402 = vld [vmem:[%s336 + $0x14] sm:$0xf]
        %v403 = vld [vmem:[%s336 + $0x18] sm:$0xf]
        %v404 = vld [vmem:[%s336 + $0x1c] sm:$0xf]
        %v405 = vld [vmem:[%s336 + $0x20] sm:$0xf]
        %v406 = vld [vmem:[%s336 + $0x24] sm:$0xf]
        %v407 = vld [vmem:[%s336 + $0x28] sm:$0xf]
        %v408 = vld [vmem:[%s336 + $0x2c] sm:$0xf]
        %v409 = vld [vmem:[%s336 + $0x30] sm:$0xf]
        %v410 = vld [vmem:[%s336 + $0x34] sm:$0xf]
        %v411 = vld [vmem:[%s336 + $0x38] sm:$0xf]
        %v412 = vld [vmem:[%s336 + $0x3c] sm:$0xf]
        %v413 = vld [vmem:[%s378] sm:$0x1]
        %v415 = vlaneseq
        %v416 = vshrl.u32 %v415, 7
        %v417 = vsub.s32 0, %v416
        %v418 = vrot.slane %v413, %v417
        %v436 = vunpack.c.l.b16 %v397
        %v437 = vunpack.c.l.b16 %v398
        %v438 = vunpack.c.l.b16 %v399
        %v439 = vunpack.c.l.b16 %v400
        %v440 = vunpack.c.l.b16 %v401
        %v441 = vunpack.c.l.b16 %v402
        %v442 = vunpack.c.l.b16 %v403
        %v443 = vunpack.c.l.b16 %v404
        %v444 = vunpack.c.l.b16 %v405
        %v445 = vunpack.c.l.b16 %v406
        %v446 = vunpack.c.l.b16 %v407
        %v447 = vunpack.c.l.b16 %v408
        %v448 = vunpack.c.l.b16 %v409
        %v449 = vunpack.c.l.b16 %v410
        %v450 = vunpack.c.l.b16 %v411
        %v451 = vunpack.c.l.b16 %v412
        %v452 = vpack.c.b16 %v437, %v436
        %v453 = vpack.c.b16 %v439, %v438
        %v454 = vpack.c.b16 %v441, %v440
        %v455 = vpack.c.b16 %v443, %v442
        %v456 = vpack.c.b16 %v445, %v444
        %v457 = vpack.c.b16 %v447, %v446
        %v458 = vpack.c.b16 %v449, %v448
        %v459 = vpack.c.b16 %v451, %v450
        %468 = vmatprep.subr.bf16.mxu0 0
        %469 = vmatpush1.bf16.msra.mxu0 %v452
        %470 = vmatprep.subr.bf16.mxu0 0
        %471 = vmatpush1.bf16.msra.mxu0 %v453
        %472 = vmatprep.subr.bf16.mxu0 0
        %473 = vmatpush1.bf16.msra.mxu0 %v454
        %474 = vmatprep.subr.bf16.mxu0 0
        %475 = vmatpush1.bf16.msra.mxu0 %v455
        %476 = vmatprep.subr.bf16.mxu0 0
        %477 = vmatpush1.bf16.msra.mxu0 %v456
        %478 = vmatprep.subr.bf16.mxu0 0
        %479 = vmatpush1.bf16.msra.mxu0 %v457
        %480 = vmatprep.subr.bf16.mxu0 0
        %481 = vmatpush1.bf16.msra.mxu0 %v458
        %482 = vmatprep.subr.bf16.mxu0 0
        %483 = vmatpush1.bf16.msra.mxu0 %v459
        %484 = vmatprep.subr.bf16.mxu0 0
        %485 = vmatpush1.bf16.msra.mxu0 0
        %486 = vmatprep.subr.bf16.mxu0 0
        %487 = vmatpush1.bf16.msra.mxu0 0
        %488 = vmatprep.subr.bf16.mxu0 0
        %489 = vmatpush1.bf16.msra.mxu0 0
        %490 = vmatprep.subr.bf16.mxu0 0
        %491 = vmatpush1.bf16.msra.mxu0 0
        %492 = vmatprep.subr.bf16.mxu0 0
        %493 = vmatpush1.bf16.msra.mxu0 0
        %494 = vmatprep.subr.bf16.mxu0 0
        %495 = vmatpush1.bf16.msra.mxu0 0
        %496 = vmatprep.subr.bf16.mxu0 0
        %497 = vmatpush1.bf16.msra.mxu0 0
        %498 = vmatprep.subr.bf16.mxu0 0
        %499 = vmatpush1.bf16.msra.mxu0 0
        %500 = vmatprep.mubr.bf16.mxu0 0
        %501 = vmatmul.mubr.bf16.gmra.mrb[0].mxu0 %v396
        %v502 = vpop.f32.mrb[0].mxu0
        %v503 = vadd.f32 %v418, %v502
        %v504 = vpop.f32.mrb[0].mxu0
        %v505 = vpop.f32.mrb[0].mxu0
        %v506 = vpop.f32.mrb[0].mxu0
        %507 = vdwg.mxu0
        %v508 = vmax.f32 %v503, 0.0
        %v509 = vld [vmem:[#allocation2] sm:$0xff]
        %v510 = vpack.c.bf16 %v508, %v508
        %v511 = vld [vmem:[%s383] sm:$0xf]
        %v512 = vld [vmem:[%s383 + $0x4] sm:$0xf]
        %v513 = vld [vmem:[%s383 + $0x8] sm:$0xf]
        %v514 = vld [vmem:[%s383 + $0xc] sm:$0xf]
        %v515 = vld [vmem:[%s383 + $0x10] sm:$0xf]
        %v516 = vld [vmem:[%s383 + $0x14] sm:$0xf]
        %v517 = vld [vmem:[%s383 + $0x18] sm:$0xf]
        %v518 = vld [vmem:[%s383 + $0x1c] sm:$0xf]
        %v519 = vld [vmem:[%s383 + $0x20] sm:$0xf]
        %v520 = vld [vmem:[%s383 + $0x24] sm:$0xf]
        %v521 = vld [vmem:[%s383 + $0x28] sm:$0xf]
        %v522 = vld [vmem:[%s383 + $0x2c] sm:$0xf]
        %v523 = vld [vmem:[%s383 + $0x30] sm:$0xf]
        %v524 = vld [vmem:[%s383 + $0x34] sm:$0xf]
        %v525 = vld [vmem:[%s383 + $0x38] sm:$0xf]
        %v526 = vld [vmem:[%s383 + $0x3c] sm:$0xf]
        %v543 = vunpack.c.l.b16 %v511
        %v544 = vunpack.c.l.b16 %v512
        %v545 = vunpack.c.l.b16 %v513
        %v546 = vunpack.c.l.b16 %v514
        %v547 = vunpack.c.l.b16 %v515
        %v548 = vunpack.c.l.b16 %v516
        %v549 = vunpack.c.l.b16 %v517
        %v550 = vunpack.c.l.b16 %v518
        %v551 = vunpack.c.l.b16 %v519
        %v552 = vunpack.c.l.b16 %v520
        %v553 = vunpack.c.l.b16 %v521
        %v554 = vunpack.c.l.b16 %v522
        %v555 = vunpack.c.l.b16 %v523
        %v556 = vunpack.c.l.b16 %v524
        %v557 = vunpack.c.l.b16 %v525
        %v558 = vunpack.c.l.b16 %v526
        %v559 = vpack.c.b16 %v544, %v543
        %v560 = vpack.c.b16 %v546, %v545
        %v561 = vpack.c.b16 %v548, %v547
        %v562 = vpack.c.b16 %v550, %v549
        %v563 = vpack.c.b16 %v552, %v551
        %v564 = vpack.c.b16 %v554, %v553
        %v565 = vpack.c.b16 %v556, %v555
        %v566 = vpack.c.b16 %v558, %v557
        %575 = vmatprep.subr.bf16.mxu0 0
        %576 = vmatpush1.bf16.msra.mxu0 %v559
        %577 = vmatprep.subr.bf16.mxu0 0
        %578 = vmatpush1.bf16.msra.mxu0 %v560
        %579 = vmatprep.subr.bf16.mxu0 0
        %580 = vmatpush1.bf16.msra.mxu0 %v561
        %581 = vmatprep.subr.bf16.mxu0 0
        %582 = vmatpush1.bf16.msra.mxu0 %v562
        %583 = vmatprep.subr.bf16.mxu0 0
        %584 = vmatpush1.bf16.msra.mxu0 %v563
        %585 = vmatprep.subr.bf16.mxu0 0
        %586 = vmatpush1.bf16.msra.mxu0 %v564
        %587 = vmatprep.subr.bf16.mxu0 0
        %588 = vmatpush1.bf16.msra.mxu0 %v565
        %589 = vmatprep.subr.bf16.mxu0 0
        %590 = vmatpush1.bf16.msra.mxu0 %v566
        %591 = vmatprep.subr.bf16.mxu0 0
        %592 = vmatpush1.bf16.msra.mxu0 0
        %593 = vmatprep.subr.bf16.mxu0 0
        %594 = vmatpush1.bf16.msra.mxu0 0
        %595 = vmatprep.subr.bf16.mxu0 0
        %596 = vmatpush1.bf16.msra.mxu0 0
        %597 = vmatprep.subr.bf16.mxu0 0
        %598 = vmatpush1.bf16.msra.mxu0 0
        %599 = vmatprep.subr.bf16.mxu0 0
        %600 = vmatpush1.bf16.msra.mxu0 0
        %601 = vmatprep.subr.bf16.mxu0 0
        %602 = vmatpush1.bf16.msra.mxu0 0
        %603 = vmatprep.subr.bf16.mxu0 0
        %604 = vmatpush1.bf16.msra.mxu0 0
        %605 = vmatprep.subr.bf16.mxu0 0
        %606 = vmatpush1.bf16.msra.mxu0 0
        %607 = vmatprep.mubr.bf16.mxu0 0
        %608 = vmatmul.mubr.bf16.gmra.mrb[0].mxu0 %v510
        %v609 = vpop.f32.mrb[0].mxu0
        %v610 = vadd.f32 0.0, %v609
        %v611 = vpop.f32.mrb[0].mxu0
        %v612 = vpop.f32.mrb[0].mxu0
        %v613 = vpop.f32.mrb[0].mxu0
        %614 = vdwg.mxu0
        %v615 = vadd.f32 %v509, %v610
        %616 = vst [vmem:[#allocation2] sm:$0xff] %v615
        %p617 = scmp.eq.s32.totalorder %s21, 1
        // Predicated region
        $region86: #{position_wise_feed_forward.1} parent=76 // pred_check
          %p618 = pneg %p617
        $region87: #{position_wise_feed_forward.1} parent=76 // pred_check_branch
          %620 = sbr.rel (%p618) target = $region89
        $region88: #{position_wise_feed_forward.1} parent=76 // pred_region
          %v621 = vld [vmem:[#allocation2] sm:$0xff]
          %v622 = vld [vmem:[%s4] sm:$0x1]
          %v624 = vlaneseq
          %v625 = vshrl.u32 %v624, 7
          %v626 = vsub.s32 0, %v625
          %v627 = vrot.slane %v622, %v626
          %v629 = vadd.f32 %v621, %v627
          %630 = vst [vmem:[%s388] sm:$0xff] %v629
        $region89: #{position_wise_feed_forward.1} parent=76 // pred_fallthru
          _
        %p631 = scmp.lt.s32.totalorder %s20, 2
        %s632 = scalar_select %p631, %s20, 2
        %s633 = smul.addr %s632, 8
        %s634 = scalar_lea.vmem %s5, %s633
        // Predicated region
        $region90: #{position_wise_feed_forward.1} parent=76 // pred_check
          %p635 = pneg %p171
        $region91: #{position_wise_feed_forward.1} parent=76 // pred_check_branch
          %637 = sbr.rel (%p635) target = $region93
        $region92: #{position_wise_feed_forward.1} parent=76 // pred_region
          _
        $region93: #{position_wise_feed_forward.1} parent=76 // pred_fallthru
          _
      $region77: #{position_wise_feed_forward.1} parent=5 // pred_fallthru
        _
      %p638 = scmp.le.s32.totalorder 2, %s11
      // Predicated region
      $region94: #{position_wise_feed_forward.1} parent=5 // pred_check
        %p639 = pneg %p638
      $region95: #{position_wise_feed_forward.1} parent=5 // pred_check_branch
        %641 = sbr.rel (%p639) target = $region97
      $region96: #{position_wise_feed_forward.1} parent=5 // pred_region
        %s642 = ssub.s32 %s11, 2
        // Predicated region
        $region98: #{position_wise_feed_forward.1} parent=96 // pred_check
          %p643 = pneg %p177
        $region99: #{position_wise_feed_forward.1} parent=96 // pred_check_branch
          %645 = sbr.rel (%p643) target = $region101
        $region100: #{position_wise_feed_forward.1} parent=96 // pred_region
          %p646 = scmp.lt.s32.totalorder %s22, 2
          %s647 = scalar_select %p646, %s22, 2
          %s648 = smul.addr %s647, 8
          %s649 = scalar_lea.vmem %s5, %s648
        $region101: #{position_wise_feed_forward.1} parent=96 // pred_fallthru
          _
      $region97: #{position_wise_feed_forward.1} parent=5 // pred_fallthru
        _
    $region6: #{position_wise_feed_forward.1} parent=1 // loop_footer
      %s15 = sadd.s32 1, %s11
    $region7: #{position_wise_feed_forward.1} parent=1 // loop_footer_branch
      %10 = sbr.rel target = $region3
    $region8: #{position_wise_feed_forward.1} parent=1 // loop_exit
      _

</llo_original>
